<compile_context>
chip_gen: v7x
topology: tpu7x:2x2x1
jax: 0.10.0
libtpu: 0.0.40
codegen_flags: <defaults>
</compile_context>

<pallas_src>
import functools

import jax
import jax.numpy as jnp
from jax.experimental import pallas as pl
from jax.experimental.pallas import tpu as pltpu

_LANE = 128
_FUSED_MAX_N = 1024            # single fused call up to this many (padded) nodes
_RESIDENT_BUDGET = 24 * 2**20  # VMEM budget for the resident-support variant


def _round_up(n, m):
    return (n + m - 1) // m * m


def _maybe_pad2(a, rows, cols):
    if rows == 0 and cols == 0:
        return a
    return jnp.pad(a, ((0, rows), (0, cols)))


# ---------------------------------------------------------------------------
# Fused small-graph kernel: support = X @ W ; out = adj @ support + bias.
# Everything stays in f32 (launch-bound regime, accuracy for free).
# ---------------------------------------------------------------------------
def _fused_kernel(x_ref, w_ref, adj_ref, b_ref, o_ref):
    support = jnp.dot(x_ref[...], w_ref[...], preferred_element_type=jnp.float32)
    o_ref[...] = (
        jnp.dot(adj_ref[...], support, preferred_element_type=jnp.float32)
        + b_ref[...]
    )


# ---------------------------------------------------------------------------
# Kernel 1 (large graphs): support row tile = X row tile @ W   (f32 out).
# ---------------------------------------------------------------------------
def _support_kernel(x_ref, w_ref, s_ref):
    s_ref[...] = jnp.dot(x_ref[...], w_ref[...], preferred_element_type=jnp.float32)


# ---------------------------------------------------------------------------
# Kernel 2 (large graphs): out row tile (resident f32 accumulator across k)
#   = sum_k adj[i, k] @ support[k] + bias.
# adj arrives as raw f32 tiles from HBM and is cast to bf16 in-kernel.
# ---------------------------------------------------------------------------
def _aggregate_resident_kernel(adj_ref, s_ref, b_ref, o_ref, *, tile_k):
    k = pl.program_id(1)

    @pl.when(k == 0)
    def _():
        # Seed the resident f32 accumulator (the output block) with the bias.
        o_ref[...] = jnp.zeros_like(o_ref) + b_ref[...]

    off = pl.multiple_of(k * tile_k, tile_k)
    a = adj_ref[...].astype(jnp.bfloat16)                    # in-kernel cast (VPU)
    s = s_ref[pl.ds(off, tile_k), :].astype(jnp.bfloat16)    # slice of resident support
    o_ref[...] += jnp.dot(a, s, preferred_element_type=jnp.float32)


def _aggregate_streamed_kernel(adj_ref, s_ref, b_ref, o_ref):
    k = pl.program_id(1)

    @pl.when(k == 0)
    def _():
        o_ref[...] = jnp.zeros_like(o_ref) + b_ref[...]

    o_ref[...] += jnp.dot(
        adj_ref[...].astype(jnp.bfloat16),
        s_ref[...].astype(jnp.bfloat16),
        preferred_element_type=jnp.float32,
    )


@jax.jit
def graph_convolution(x, adj, weight, bias):
    n, f_in = x.shape
    f_out = weight.shape[1]
    f_pad = _round_up(max(f_out, _LANE), _LANE)   # pad to 128 lanes only, never more

    x32 = x.astype(jnp.float32)
    adj32 = adj.astype(jnp.float32)
    w_p = _maybe_pad2(weight.astype(jnp.float32), 0, f_pad - f_out)
    b_p = _maybe_pad2(bias.reshape(1, f_out).astype(jnp.float32), 0, f_pad - f_out)

    # -------- small graphs: one fused pallas_call --------
    n_small = _round_up(max(n, 8), 8)
    if n_small <= _FUSED_MAX_N:
        x_p = _maybe_pad2(x32, n_small - n, 0)
        adj_p = _maybe_pad2(adj32, n_small - n, n_small - n)
        out = pl.pallas_call(
            _fused_kernel,
            out_shape=jax.ShapeDtypeStruct((n_small, f_pad), jnp.float32),
            grid=(1,),
            in_specs=[
                pl.BlockSpec((n_small, f_in), lambda i: (0, 0)),
                pl.BlockSpec((f_in, f_pad), lambda i: (0, 0)),
                pl.BlockSpec((n_small, n_small), lambda i: (0, 0)),
                pl.BlockSpec((1, f_pad), lambda i: (0, 0)),
            ],
            out_specs=pl.BlockSpec((n_small, f_pad), lambda i: (0, 0)),
        )(x_p, w_p, adj_p, b_p)
        return out[:n, :f_out]

    # -------- larger graphs: two tiled kernels --------
    # Pad N to a multiple of 256 so the streaming tile never collapses to 128.
    n_pad = _round_up(n, 256)
    pad_n = n_pad - n

    # Row tile: prefer 512 but keep >= 2 row blocks (v7x megacore split).
    if n_pad % 512 == 0 and n_pad // 512 >= 2:
        tile_m = 512
    else:
        tile_m = 256
    # Reduction tile: as wide as divides n_pad (up to 2048) -> fewer grid steps.
    tile_k = next(t for t in (2048, 1024, 512, 256) if n_pad % t == 0)

    x_p = _maybe_pad2(x32, pad_n, 0)
    adj_p = _maybe_pad2(adj32, pad_n, pad_n)   # zero rows/cols contribute nothing

    n_row_m = n_pad // tile_m
    n_row_k = n_pad // tile_k

    # ---- kernel 1: support = X @ W (f32, computed once) ----
    support = pl.pallas_call(
        _support_kernel,
        out_shape=jax.ShapeDtypeStruct((n_pad, f_pad), jnp.float32),
        grid=(n_row_m,),
        in_specs=[
            pl.BlockSpec((tile_m, f_in), lambda i: (i, 0)),
            pl.BlockSpec((f_in, f_pad), lambda i: (0, 0)),
        ],
        out_specs=pl.BlockSpec((tile_m, f_pad), lambda i: (i, 0)),
        compiler_params=pltpu.CompilerParams(dimension_semantics=("parallel",)),
    )(x_p, w_p)

    # ---- kernel 2: out = adj @ support + bias ----
    # Keep support resident in VMEM (HBM-read once) when it fits; else stream
    # (tile_k, f_pad) tiles per reduction step (costs ~f_pad/tile_k extra traffic).
    support_bytes = n_pad * f_pad * 4
    resident_budget = (
        2 * support_bytes                # resident support (assume double buffer)
        + 2 * tile_m * tile_k * 4        # adj f32 double buffer
        + 2 * tile_m * f_pad * 4         # f32 output double buffer
    )
    resident = resident_budget <= _RESIDENT_BUDGET

    if resident:
        kernel2 = functools.partial(_aggregate_resident_kernel, tile_k=tile_k)
        support_spec = pl.BlockSpec((n_pad, f_pad), lambda i, k: (0, 0))
        vmem_limit = 32 * 2**20 if resident_budget > 14 * 2**20 else None
    else:
        kernel2 = _aggregate_streamed_kernel
        support_spec = pl.BlockSpec((tile_k, f_pad), lambda i, k: (k, 0))
        vmem_limit = None

    out = pl.pallas_call(
        kernel2,
        out_shape=jax.ShapeDtypeStruct((n_pad, f_pad), jnp.float32),
        grid=(n_row_m, n_row_k),
        in_specs=[
            pl.BlockSpec((tile_m, tile_k), lambda i, k: (i, k)),   # adj f32 tile
            support_spec,                                          # support (resident/streamed)
            pl.BlockSpec((1, f_pad), lambda i, k: (0, 0)),         # bias (f32)
        ],
        out_specs=pl.BlockSpec((tile_m, f_pad), lambda i, k: (i, 0)),
        compiler_params=pltpu.CompilerParams(
            dimension_semantics=("parallel", "arbitrary"),
            vmem_limit_bytes=vmem_limit,
        ),
    )(adj_p, support, b_p)

    return out[:n, :f_out]


def init_params(key, in_features, out_features):
    # kaiming_uniform_ on an [in, out] tensor: fan_in = size(1), gain = sqrt(2)
    # -> bound = sqrt(6 / out_features); bias initialized to zeros.
    bound = jnp.sqrt(6.0 / out_features)
    w = jax.random.uniform(
        key, (in_features, out_features), jnp.float32, minval=-bound, maxval=bound
    )
    b = jnp.zeros((out_features,), jnp.float32)
    return w, b


def _make_inputs(key, n, f_in, f_out):
    k_x, k_adj, k_w, k_b = jax.random.split(key, 4)
    x = jax.random.normal(k_x, (n, f_in), jnp.float32)
    # Symmetric normalized adjacency (dense) with self loops.
    a = (jax.random.uniform(k_adj, (n, n)) < 0.05).astype(jnp.float32)
    a = jnp.maximum(a, a.T) + jnp.eye(n, dtype=jnp.float32)
    d_inv_sqrt = 1.0 / jnp.sqrt(jnp.sum(a, axis=1))
    adj = a * d_inv_sqrt[:, None] * d_inv_sqrt[None, :]
    w, _ = init_params(k_w, f_in, f_out)
    # Nonzero bias to exercise the broadcast-add epilogue.
    b = 0.1 * jax.random.normal(k_b, (f_out,), jnp.float32)
    return x, adj, w, b


if __name__ == "__main__":
    key0 = jax.random.PRNGKey(0)
    k_small, k_large = jax.random.split(key0)

    F_IN, F_OUT = 64, 32

    # ---- small graph (N=128): fully fused single-kernel path ----
    x, adj, w, b = _make_inputs(k_small, 128, F_IN, F_OUT)
    out = jax.block_until_ready(graph_convolution(x, adj, w, b))
    ref = adj @ (x @ w) + b[None, :]
    assert out.shape == (128, F_OUT)
    err = float(jnp.max(jnp.abs(out - ref)))
    assert jnp.allclose(out, ref, atol=1e-2, rtol=1e-2), f"fused max_err={err}"

    # ---- larger graph (N=1536): tiled path (support kernel + resident-support aggregate) ----
    x2, adj2, w2, b2 = _make_inputs(k_large, 1536, F_IN, F_OUT)
    out2 = jax.block_until_ready(graph_convolution(x2, adj2, w2, b2))
    ref2 = adj2 @ (x2 @ w2) + b2[None, :]
    assert out2.shape == (1536, F_OUT)
    err2 = float(jnp.max(jnp.abs(out2 - ref2)))
    assert jnp.allclose(out2, ref2, atol=5e-2, rtol=5e-2), f"tiled max_err={err2}"

    print("KERNEL_OK")
</pallas_src>

<mosaic_0001>
module attributes {stable_mosaic.version = 11 : i64} {
  func.func @_fused_kernel(%arg0: i32, %arg1: memref<128x64xf32, #tpu.memory_space<vmem>>, %arg2: memref<64x128xf32, #tpu.memory_space<vmem>>, %arg3: memref<128x128xf32, #tpu.memory_space<vmem>>, %arg4: memref<1x128xf32, #tpu.memory_space<vmem>>, %arg5: memref<128x128xf32, #tpu.memory_space<vmem>>) attributes {dimension_semantics = [#tpu.dimension_semantics<arbitrary>], iteration_bounds = array<i64: 1>, scalar_prefetch = 0 : i64, scratch_operands = 0 : i64, tpu.core_type = #tpu.core_type<tc>, window_params = [{pipeline_mode = #tpu.pipeline_mode<synchronous>, transform_indices = @transform_0, window_bounds = array<i64: 128, 64>}, {pipeline_mode = #tpu.pipeline_mode<synchronous>, transform_indices = @transform_1, window_bounds = array<i64: 64, 128>}, {pipeline_mode = #tpu.pipeline_mode<synchronous>, transform_indices = @transform_2, window_bounds = array<i64: 128, 128>}, {pipeline_mode = #tpu.pipeline_mode<synchronous>, transform_indices = @transform_3, window_bounds = array<i64: 1, 128>}, {pipeline_mode = #tpu.pipeline_mode<synchronous>, transform_indices = @transform_4, window_bounds = array<i64: 128, 128>}]} {
    %c0 = arith.constant 0 : index
    %c0_0 = arith.constant 0 : index
    %0 = vector.load %arg1[%c0, %c0_0] : memref<128x64xf32, #tpu.memory_space<vmem>>, vector<128x64xf32>
    %c0_1 = arith.constant 0 : index
    %c0_2 = arith.constant 0 : index
    %1 = vector.load %arg2[%c0_1, %c0_2] : memref<64x128xf32, #tpu.memory_space<vmem>>, vector<64x128xf32>
    %cst = arith.constant dense<0.000000e+00> : vector<128x128xf32>
    %2 = tpu.matmul %0, %1, %cst {dimension_numbers = #tpu.dot_dimension_numbers<[1], [0], [0], [1], [0, 0, 1, 1], [], []>} : vector<128x64xf32>, vector<64x128xf32>, vector<128x128xf32> -> vector<128x128xf32>
    %c0_3 = arith.constant 0 : index
    %c0_4 = arith.constant 0 : index
    %3 = vector.load %arg3[%c0_3, %c0_4] : memref<128x128xf32, #tpu.memory_space<vmem>>, vector<128x128xf32>
    %cst_5 = arith.constant dense<0.000000e+00> : vector<128x128xf32>
    %4 = tpu.matmul %3, %2, %cst_5 {dimension_numbers = #tpu.dot_dimension_numbers<[1], [0], [0], [1], [0, 0, 1, 1], [], []>} : vector<128x128xf32>, vector<128x128xf32>, vector<128x128xf32> -> vector<128x128xf32>
    %c0_6 = arith.constant 0 : index
    %c0_7 = arith.constant 0 : index
    %5 = vector.load %arg4[%c0_6, %c0_7] : memref<1x128xf32, #tpu.memory_space<vmem>>, vector<1x128xf32>
    %6 = vector.broadcast %5 : vector<1x128xf32> to vector<128x128xf32>
    %7 = arith.addf %4, %6 : vector<128x128xf32>
    %c0_8 = arith.constant 0 : index
    %c0_9 = arith.constant 0 : index
    %8 = vector.load %arg5[%c0_8, %c0_9] : memref<128x128xf32, #tpu.memory_space<vmem>>, vector<128x128xf32>
    tpu.vector_store %arg5[%c0_8, %c0_9], %7 {strides = array<i32>} : memref<128x128xf32, #tpu.memory_space<vmem>>, vector<128x128xf32>,
    return
  }
  func.func @transform_0(%arg0: i32) -> (i32, i32) {
    %c0_i32 = arith.constant 0 : i32
    %c0_i32_0 = arith.constant 0 : i32
    %c0_i32_1 = arith.constant 0 : i32
    return %c0_i32, %c0_i32_0 : i32, i32
  }
  func.func @transform_1(%arg0: i32) -> (i32, i32) {
    %c0_i32 = arith.constant 0 : i32
    %c0_i32_0 = arith.constant 0 : i32
    %c0_i32_1 = arith.constant 0 : i32
    return %c0_i32, %c0_i32_0 : i32, i32
  }
  func.func @transform_2(%arg0: i32) -> (i32, i32) {
    %c0_i32 = arith.constant 0 : i32
    %c0_i32_0 = arith.constant 0 : i32
    %c0_i32_1 = arith.constant 0 : i32
    return %c0_i32, %c0_i32_0 : i32, i32
  }
  func.func @transform_3(%arg0: i32) -> (i32, i32) {
    %c0_i32 = arith.constant 0 : i32
    %c0_i32_0 = arith.constant 0 : i32
    %c0_i32_1 = arith.constant 0 : i32
    return %c0_i32, %c0_i32_0 : i32, i32
  }
  func.func @transform_4(%arg0: i32) -> (i32, i32) {
    %c0_i32 = arith.constant 0 : i32
    %c0_i32_0 = arith.constant 0 : i32
    %c0_i32_1 = arith.constant 0 : i32
    return %c0_i32, %c0_i32_0 : i32, i32
  }
}

</mosaic_0001>

<llo_original>
// kernel: graph_convolution.1
$region0: #{graph_convolution.1}
  #allocation0 [shape = 'u32[]', space=smem, size = 0x4, offset = 0x4, fixed_abs, tag = 'smem constant byte address 0x4 - core index']
  #allocation1 [shape = 'u32[144,128]{1,0:T(1,128)}', space=vmem, size = 0x12000, scoped, tag = 'internal scratch']
  %s0 = inlined_call_operand.vmem [shape: f32[128,64], index: 0, kind: input, shape index: {}]
  %s1 = inlined_call_operand.vmem [shape: f32[64,128], index: 1, kind: input, shape index: {}]
  %s2 = inlined_call_operand.vmem [shape: f32[128,128], index: 2, kind: input, shape index: {}]
  %s3 = inlined_call_operand.vmem [shape: f32[1,128], index: 3, kind: input, shape index: {}]
  %s4 = inlined_call_operand.vmem [shape: f32[128,128], index: 4, kind: output, shape index: {}]
  %s5 = sld [smem:[#allocation0]]
  $region26: #{graph_convolution.1} parent=0
    _
  %s7 = ssub.s32 1, %s5
  %s8 = scalar_select 0, %s7, %s5
  // Predicated region
  $region2: #{graph_convolution.1} parent=0 // pred_check
    _
  $region3: #{graph_convolution.1} parent=0 // pred_check_branch
    %10 = sbr.rel (0) target = $region5
  $region4: #{graph_convolution.1} parent=0 // pred_region
    _
  $region5: #{graph_convolution.1} parent=0 // pred_fallthru
    _
  // Predicated region
  $region6: #{graph_convolution.1} parent=0 // pred_check
    _
  $region7: #{graph_convolution.1} parent=0 // pred_check_branch
    %12 = sbr.rel (0) target = $region9
  $region8: #{graph_convolution.1} parent=0 // pred_region
    _
  $region9: #{graph_convolution.1} parent=0 // pred_fallthru
    _
  // Predicated region
  $region10: #{graph_convolution.1} parent=0 // pred_check
    _
  $region11: #{graph_convolution.1} parent=0 // pred_check_branch
    %14 = sbr.rel (0) target = $region13
  $region12: #{graph_convolution.1} parent=0 // pred_region
    _
  $region13: #{graph_convolution.1} parent=0 // pred_fallthru
    _
  // Predicated region
  $region14: #{graph_convolution.1} parent=0 // pred_check
    _
  $region15: #{graph_convolution.1} parent=0 // pred_check_branch
    %16 = sbr.rel (0) target = $region17
  $region16: #{graph_convolution.1} parent=0 // pred_region
    _
  $region17: #{graph_convolution.1} parent=0 // pred_fallthru
    _
  %v17 = vld [vmem:[%s0] sm:$0xff]
  %v18 = vld [vmem:[%s0 + $0x8] sm:$0xff]
  %v19 = vld [vmem:[%s0 + $0x10] sm:$0xff]
  %v20 = vld [vmem:[%s0 + $0x18] sm:$0xff]
  %v21 = vld [vmem:[%s0 + $0x20] sm:$0xff]
  %v22 = vld [vmem:[%s0 + $0x28] sm:$0xff]
  %v23 = vld [vmem:[%s0 + $0x30] sm:$0xff]
  %v24 = vld [vmem:[%s0 + $0x38] sm:$0xff]
  %v25 = vld [vmem:[%s0 + $0x40] sm:$0xff]
  %v26 = vld [vmem:[%s0 + $0x48] sm:$0xff]
  %v27 = vld [vmem:[%s0 + $0x50] sm:$0xff]
  %v28 = vld [vmem:[%s0 + $0x58] sm:$0xff]
  %v29 = vld [vmem:[%s0 + $0x60] sm:$0xff]
  %v30 = vld [vmem:[%s0 + $0x68] sm:$0xff]
  %v31 = vld [vmem:[%s0 + $0x70] sm:$0xff]
  %v32 = vld [vmem:[%s0 + $0x78] sm:$0xff]
  %v33 = vld [vmem:[%s1] sm:$0xff]
  %v34 = vld [vmem:[%s1 + $0x8] sm:$0xff]
  %v35 = vld [vmem:[%s1 + $0x10] sm:$0xff]
  %v36 = vld [vmem:[%s1 + $0x18] sm:$0xff]
  %v37 = vld [vmem:[%s1 + $0x20] sm:$0xff]
  %v38 = vld [vmem:[%s1 + $0x28] sm:$0xff]
  %v39 = vld [vmem:[%s1 + $0x30] sm:$0xff]
  %v40 = vld [vmem:[%s1 + $0x38] sm:$0xff]
  %vm41 = vcmask 523264
  %v43 = vsel %vm41, %v17, 0
  %v46 = vsel %vm41, %v18, 0
  %v49 = vsel %vm41, %v19, 0
  %v52 = vsel %vm41, %v20, 0
  %v55 = vsel %vm41, %v21, 0
  %v58 = vsel %vm41, %v22, 0
  %v61 = vsel %vm41, %v23, 0
  %v64 = vsel %vm41, %v24, 0
  %v67 = vsel %vm41, %v25, 0
  %v70 = vsel %vm41, %v26, 0
  %v73 = vsel %vm41, %v27, 0
  %v76 = vsel %vm41, %v28, 0
  %v79 = vsel %vm41, %v29, 0
  %v82 = vsel %vm41, %v30, 0
  %v85 = vsel %vm41, %v31, 0
  %v88 = vsel %vm41, %v32, 0
  %90 = vmatprep.subr.mxu0 0.0
  %91 = vmatpush1.msra.mxu0 %v33
  %92 = vmatprep.subr.mxu0 0.0
  %93 = vmatpush1.msra.mxu0 %v34
  %94 = vmatprep.subr.mxu0 0.0
  %95 = vmatpush1.msra.mxu0 %v35
  %96 = vmatprep.subr.mxu0 0.0
  %97 = vmatpush1.msra.mxu0 %v36
  %98 = vmatprep.subr.mxu0 0.0
  %99 = vmatpush1.msra.mxu0 %v37
  %100 = vmatprep.subr.mxu0 0.0
  %101 = vmatpush1.msra.mxu0 %v38
  %102 = vmatprep.subr.mxu0 0.0
  %103 = vmatpush1.msra.mxu0 %v39
  %104 = vmatprep.subr.mxu0 0.0
  %105 = vmatpush1.msra.mxu0 %v40
  %106 = vmatprep.subr.mxu0 0.0
  %107 = vmatpush1.msra.mxu0 0.0
  %108 = vmatprep.subr.mxu0 0.0
  %109 = vmatpush1.msra.mxu0 0.0
  %110 = vmatprep.subr.mxu0 0.0
  %111 = vmatpush1.msra.mxu0 0.0
  %112 = vmatprep.subr.mxu0 0.0
  %113 = vmatpush1.msra.mxu0 0.0
  %114 = vmatprep.subr.mxu0 0.0
  %115 = vmatpush1.msra.mxu0 0.0
  %116 = vmatprep.subr.mxu0 0.0
  %117 = vmatpush1.msra.mxu0 0.0
  %118 = vmatprep.subr.mxu0 0.0
  %119 = vmatpush1.msra.mxu0 0.0
  %120 = vmatprep.subr.mxu0 0.0
  %121 = vmatpush1.msra.mxu0 0.0
  %122 = vmatprep.subr.mxu0 0.0
  %123 = vmatpush1.msra.mxu0 0.0
  %124 = vmatprep.subr.mxu0 0.0
  %125 = vmatpush1.msra.mxu0 0.0
  %126 = vmatprep.subr.mxu0 0.0
  %127 = vmatpush1.msra.mxu0 0.0
  %128 = vmatprep.subr.mxu0 0.0
  %129 = vmatpush1.msra.mxu0 0.0
  %130 = vmatprep.subr.mxu0 0.0
  %131 = vmatpush1.msra.mxu0 0.0
  %132 = vmatprep.subr.mxu0 0.0
  %133 = vmatpush1.msra.mxu0 0.0
  %134 = vmatprep.subr.mxu0 0.0
  %135 = vmatpush1.msra.mxu0 0.0
  %136 = vmatprep.subr.mxu0 0.0
  %137 = vmatpush1.msra.mxu0 0.0
  %138 = vmatprep.subr.mxu0 0.0
  %139 = vmatpush1.msra.mxu0 0.0
  %140 = vmatprep.subr.mxu0 0.0
  %141 = vmatpush1.msra.mxu0 0.0
  %142 = vmatprep.subr.mxu0 0.0
  %143 = vmatpush1.msra.mxu0 0.0
  %144 = vmatprep.subr.mxu0 0.0
  %145 = vmatpush1.msra.mxu0 0.0
  %146 = vmatprep.subr.mxu0 0.0
  %147 = vmatpush1.msra.mxu0 0.0
  %148 = vmatprep.subr.mxu0 0.0
  %149 = vmatpush1.msra.mxu0 0.0
  %150 = vmatprep.subr.mxu0 0.0
  %151 = vmatpush1.msra.mxu0 0.0
  %152 = vmatprep.subr.mxu0 0.0
  %153 = vmatpush1.msra.mxu0 0.0
  %154 = vmatprep.mubr.f32.mxu0 0.0
  %155 = vmatmul.mubr.f32.gmra.mrb[0].mxu0 %v43
  %v156 = vpop.f32.mrb[0].mxu0
  %v157 = vadd.f32 0.0, %v156
  %v158 = vpop.f32.mrb[0].mxu0
  %159 = vmatprep.mubr.f32.mxu0 0.0
  %160 = vmatmul.mubr.f32.gmra.mrb[0].mxu0 %v46
  %v161 = vpop.f32.mrb[0].mxu0
  %v162 = vadd.f32 0.0, %v161
  %v163 = vpop.f32.mrb[0].mxu0
  %164 = vmatprep.mubr.f32.mxu0 0.0
  %165 = vmatmul.mubr.f32.gmra.mrb[0].mxu0 %v49
  %v166 = vpop.f32.mrb[0].mxu0
  %v167 = vadd.f32 0.0, %v166
  %v168 = vpop.f32.mrb[0].mxu0
  %169 = vmatprep.mubr.f32.mxu0 0.0
  %170 = vmatmul.mubr.f32.gmra.mrb[0].mxu0 %v52
  %v171 = vpop.f32.mrb[0].mxu0
  %v172 = vadd.f32 0.0, %v171
  %v173 = vpop.f32.mrb[0].mxu0
  %174 = vmatprep.mubr.f32.mxu0 0.0
  %175 = vmatmul.mubr.f32.gmra.mrb[0].mxu0 %v55
  %v176 = vpop.f32.mrb[0].mxu0
  %v177 = vadd.f32 0.0, %v176
  %v178 = vpop.f32.mrb[0].mxu0
  %179 = vmatprep.mubr.f32.mxu0 0.0
  %180 = vmatmul.mubr.f32.gmra.mrb[0].mxu0 %v58
  %v181 = vpop.f32.mrb[0].mxu0
  %v182 = vadd.f32 0.0, %v181
  %v183 = vpop.f32.mrb[0].mxu0
  %184 = vmatprep.mubr.f32.mxu0 0.0
  %185 = vmatmul.mubr.f32.gmra.mrb[0].mxu0 %v61
  %v186 = vpop.f32.mrb[0].mxu0
  %v187 = vadd.f32 0.0, %v186
  %v188 = vpop.f32.mrb[0].mxu0
  %189 = vmatprep.mubr.f32.mxu0 0.0
  %190 = vmatmul.mubr.f32.gmra.mrb[0].mxu0 %v64
  %v191 = vpop.f32.mrb[0].mxu0
  %v192 = vadd.f32 0.0, %v191
  %v193 = vpop.f32.mrb[0].mxu0
  %194 = vmatprep.mubr.f32.mxu0 0.0
  %195 = vmatmul.mubr.f32.gmra.mrb[0].mxu0 %v67
  %v196 = vpop.f32.mrb[0].mxu0
  %v197 = vadd.f32 0.0, %v196
  %v198 = vpop.f32.mrb[0].mxu0
  %199 = vmatprep.mubr.f32.mxu0 0.0
  %200 = vmatmul.mubr.f32.gmra.mrb[0].mxu0 %v70
  %v201 = vpop.f32.mrb[0].mxu0
  %v202 = vadd.f32 0.0, %v201
  %v203 = vpop.f32.mrb[0].mxu0
  %204 = vmatprep.mubr.f32.mxu0 0.0
  %205 = vmatmul.mubr.f32.gmra.mrb[0].mxu0 %v73
  %v206 = vpop.f32.mrb[0].mxu0
  %v207 = vadd.f32 0.0, %v206
  %v208 = vpop.f32.mrb[0].mxu0
  %209 = vmatprep.mubr.f32.mxu0 0.0
  %210 = vmatmul.mubr.f32.gmra.mrb[0].mxu0 %v76
  %v211 = vpop.f32.mrb[0].mxu0
  %v212 = vadd.f32 0.0, %v211
  %v213 = vpop.f32.mrb[0].mxu0
  %214 = vmatprep.mubr.f32.mxu0 0.0
  %215 = vmatmul.mubr.f32.gmra.mrb[0].mxu0 %v79
  %v216 = vpop.f32.mrb[0].mxu0
  %v217 = vadd.f32 0.0, %v216
  %v218 = vpop.f32.mrb[0].mxu0
  %219 = vmatprep.mubr.f32.mxu0 0.0
  %220 = vmatmul.mubr.f32.gmra.mrb[0].mxu0 %v82
  %v221 = vpop.f32.mrb[0].mxu0
  %v222 = vadd.f32 0.0, %v221
  %v223 = vpop.f32.mrb[0].mxu0
  %224 = vmatprep.mubr.f32.mxu0 0.0
  %225 = vmatmul.mubr.f32.gmra.mrb[0].mxu0 %v85
  %v226 = vpop.f32.mrb[0].mxu0
  %v227 = vadd.f32 0.0, %v226
  %v228 = vpop.f32.mrb[0].mxu0
  %229 = vmatprep.mubr.f32.mxu0 0.0
  %230 = vmatmul.mubr.f32.gmra.mrb[0].mxu0 %v88
  %v231 = vpop.f32.mrb[0].mxu0
  %v232 = vadd.f32 0.0, %v231
  %v233 = vpop.f32.mrb[0].mxu0
  %234 = vdwg.mxu0
  %v235 = vld [vmem:[%s2] sm:$0xff]
  %v236 = vld [vmem:[%s2 + $0x8] sm:$0xff]
  %v237 = vld [vmem:[%s2 + $0x10] sm:$0xff]
  %v238 = vld [vmem:[%s2 + $0x18] sm:$0xff]
  %v239 = vld [vmem:[%s2 + $0x20] sm:$0xff]
  %v240 = vld [vmem:[%s2 + $0x28] sm:$0xff]
  %v241 = vld [vmem:[%s2 + $0x30] sm:$0xff]
  %v242 = vld [vmem:[%s2 + $0x38] sm:$0xff]
  %v243 = vld [vmem:[%s2 + $0x40] sm:$0xff]
  %v244 = vld [vmem:[%s2 + $0x48] sm:$0xff]
  %v245 = vld [vmem:[%s2 + $0x50] sm:$0xff]
  %v246 = vld [vmem:[%s2 + $0x58] sm:$0xff]
  %v247 = vld [vmem:[%s2 + $0x60] sm:$0xff]
  %v248 = vld [vmem:[%s2 + $0x68] sm:$0xff]
  %v249 = vld [vmem:[%s2 + $0x70] sm:$0xff]
  %v250 = vld [vmem:[%s2 + $0x78] sm:$0xff]
  %v251 = vld [vmem:[%s3] sm:$0x1]
  %v253 = vlaneseq
  %v254 = vshrl.u32 %v253, 7
  %v255 = vsub.s32 0, %v254
  %v256 = vrot.slane %v251, %v255
  %258 = vmatprep.subr.mxu0 0.0
  %259 = vmatpush1.msra.mxu0 %v157
  %260 = vmatprep.subr.mxu0 0.0
  %261 = vmatpush1.msra.mxu0 %v162
  %262 = vmatprep.subr.mxu0 0.0
  %263 = vmatpush1.msra.mxu0 %v167
  %264 = vmatprep.subr.mxu0 0.0
  %265 = vmatpush1.msra.mxu0 %v172
  %266 = vmatprep.subr.mxu0 0.0
  %267 = vmatpush1.msra.mxu0 %v177
  %268 = vmatprep.subr.mxu0 0.0
  %269 = vmatpush1.msra.mxu0 %v182
  %270 = vmatprep.subr.mxu0 0.0
  %271 = vmatpush1.msra.mxu0 %v187
  %272 = vmatprep.subr.mxu0 0.0
  %273 = vmatpush1.msra.mxu0 %v192
  %274 = vmatprep.subr.mxu0 0.0
  %275 = vmatpush1.msra.mxu0 %v197
  %276 = vmatprep.subr.mxu0 0.0
  %277 = vmatpush1.msra.mxu0 %v202
  %278 = vmatprep.subr.mxu0 0.0
  %279 = vmatpush1.msra.mxu0 %v207
  %280 = vmatprep.subr.mxu0 0.0
  %281 = vmatpush1.msra.mxu0 %v212
  %282 = vmatprep.subr.mxu0 0.0
  %283 = vmatpush1.msra.mxu0 %v217
  %284 = vmatprep.subr.mxu0 0.0
  %285 = vmatpush1.msra.mxu0 %v222
  %286 = vmatprep.subr.mxu0 0.0
  %287 = vmatpush1.msra.mxu0 %v227
  %288 = vmatprep.subr.mxu0 0.0
  %289 = vmatpush1.msra.mxu0 %v232
  %290 = vmatprep.subr.mxu0 0.0
  %291 = vmatpush1.msra.mxu0 0.0
  %292 = vmatprep.subr.mxu0 0.0
  %293 = vmatpush1.msra.mxu0 0.0
  %294 = vmatprep.subr.mxu0 0.0
  %295 = vmatpush1.msra.mxu0 0.0
  %296 = vmatprep.subr.mxu0 0.0
  %297 = vmatpush1.msra.mxu0 0.0
  %298 = vmatprep.subr.mxu0 0.0
  %299 = vmatpush1.msra.mxu0 0.0
  %300 = vmatprep.subr.mxu0 0.0
  %301 = vmatpush1.msra.mxu0 0.0
  %302 = vmatprep.subr.mxu0 0.0
  %303 = vmatpush1.msra.mxu0 0.0
  %304 = vmatprep.subr.mxu0 0.0
  %305 = vmatpush1.msra.mxu0 0.0
  %306 = vmatprep.subr.mxu0 0.0
  %307 = vmatpush1.msra.mxu0 0.0
  %308 = vmatprep.subr.mxu0 0.0
  %309 = vmatpush1.msra.mxu0 0.0
  %310 = vmatprep.subr.mxu0 0.0
  %311 = vmatpush1.msra.mxu0 0.0
  %312 = vmatprep.subr.mxu0 0.0
  %313 = vmatpush1.msra.mxu0 0.0
  %314 = vmatprep.subr.mxu0 0.0
  %315 = vmatpush1.msra.mxu0 0.0
  %316 = vmatprep.subr.mxu0 0.0
  %317 = vmatpush1.msra.mxu0 0.0
  %318 = vmatprep.subr.mxu0 0.0
  %319 = vmatpush1.msra.mxu0 0.0
  %320 = vmatprep.subr.mxu0 0.0
  %321 = vmatpush1.msra.mxu0 0.0
  %322 = vmatprep.mubr.f32.mxu0 0.0
  %323 = vmatmul.mubr.f32.gmra.mrb[0].mxu0 %v235
  %v324 = vpop.f32.mrb[0].mxu0
  %v325 = vadd.f32 %v256, %v324
  %v326 = vpop.f32.mrb[0].mxu0
  %327 = vmatprep.mubr.f32.mxu0 0.0
  %328 = vmatmul.mubr.f32.gmra.mrb[0].mxu0 %v236
  %v329 = vpop.f32.mrb[0].mxu0
  %v330 = vadd.f32 %v256, %v329
  %v331 = vpop.f32.mrb[0].mxu0
  %332 = vmatprep.mubr.f32.mxu0 0.0
  %333 = vmatmul.mubr.f32.gmra.mrb[0].mxu0 %v237
  %v334 = vpop.f32.mrb[0].mxu0
  %v335 = vadd.f32 %v256, %v334
  %v336 = vpop.f32.mrb[0].mxu0
  %337 = vmatprep.mubr.f32.mxu0 0.0
  %338 = vmatmul.mubr.f32.gmra.mrb[0].mxu0 %v238
  %v339 = vpop.f32.mrb[0].mxu0
  %v340 = vadd.f32 %v256, %v339
  %v341 = vpop.f32.mrb[0].mxu0
  %342 = vmatprep.mubr.f32.mxu0 0.0
  %343 = vmatmul.mubr.f32.gmra.mrb[0].mxu0 %v239
  %v344 = vpop.f32.mrb[0].mxu0
  %v345 = vadd.f32 %v256, %v344
  %v346 = vpop.f32.mrb[0].mxu0
  %347 = vmatprep.mubr.f32.mxu0 0.0
  %348 = vmatmul.mubr.f32.gmra.mrb[0].mxu0 %v240
  %v349 = vpop.f32.mrb[0].mxu0
  %v350 = vadd.f32 %v256, %v349
  %v351 = vpop.f32.mrb[0].mxu0
  %352 = vmatprep.mubr.f32.mxu0 0.0
  %353 = vmatmul.mubr.f32.gmra.mrb[0].mxu0 %v241
  %v354 = vpop.f32.mrb[0].mxu0
  %v355 = vadd.f32 %v256, %v354
  %v356 = vpop.f32.mrb[0].mxu0
  %357 = vmatprep.mubr.f32.mxu0 0.0
  %358 = vmatmul.mubr.f32.gmra.mrb[0].mxu0 %v242
  %v359 = vpop.f32.mrb[0].mxu0
  %v360 = vadd.f32 %v256, %v359
  %v361 = vpop.f32.mrb[0].mxu0
  %362 = vmatprep.mubr.f32.mxu0 0.0
  %363 = vmatmul.mubr.f32.gmra.mrb[0].mxu0 %v243
  %v364 = vpop.f32.mrb[0].mxu0
  %v365 = vadd.f32 %v256, %v364
  %v366 = vpop.f32.mrb[0].mxu0
  %367 = vmatprep.mubr.f32.mxu0 0.0
  %368 = vmatmul.mubr.f32.gmra.mrb[0].mxu0 %v244
  %v369 = vpop.f32.mrb[0].mxu0
  %v370 = vadd.f32 %v256, %v369
  %v371 = vpop.f32.mrb[0].mxu0
  %372 = vmatprep.mubr.f32.mxu0 0.0
  %373 = vmatmul.mubr.f32.gmra.mrb[0].mxu0 %v245
  %v374 = vpop.f32.mrb[0].mxu0
  %v375 = vadd.f32 %v256, %v374
  %v376 = vpop.f32.mrb[0].mxu0
  %377 = vmatprep.mubr.f32.mxu0 0.0
  %378 = vmatmul.mubr.f32.gmra.mrb[0].mxu0 %v246
  %v379 = vpop.f32.mrb[0].mxu0
  %v380 = vadd.f32 %v256, %v379
  %v381 = vpop.f32.mrb[0].mxu0
  %382 = vmatprep.mubr.f32.mxu0 0.0
  %383 = vmatmul.mubr.f32.gmra.mrb[0].mxu0 %v247
  %v384 = vpop.f32.mrb[0].mxu0
  %v385 = vadd.f32 %v256, %v384
  %v386 = vpop.f32.mrb[0].mxu0
  %387 = vmatprep.mubr.f32.mxu0 0.0
  %388 = vmatmul.mubr.f32.gmra.mrb[0].mxu0 %v248
  %v389 = vpop.f32.mrb[0].mxu0
  %v390 = vadd.f32 %v256, %v389
  %v391 = vpop.f32.mrb[0].mxu0
  %392 = vmatprep.mubr.f32.mxu0 0.0
  %393 = vmatmul.mubr.f32.gmra.mrb[0].mxu0 %v249
  %v394 = vpop.f32.mrb[0].mxu0
  %v395 = vadd.f32 %v256, %v394
  %v396 = vpop.f32.mrb[0].mxu0
  %397 = vmatprep.mubr.f32.mxu0 0.0
  %398 = vmatmul.mubr.f32.gmra.mrb[0].mxu0 %v250
  %v399 = vpop.f32.mrb[0].mxu0
  %v400 = vadd.f32 %v256, %v399
  %v401 = vpop.f32.mrb[0].mxu0
  %402 = vdwg.mxu0
  %403 = vst [vmem:[%s4] sm:$0xff] %v325
  %404 = vst [vmem:[%s4 + $0x8] sm:$0xff] %v330
  %405 = vst [vmem:[%s4 + $0x10] sm:$0xff] %v335
  %406 = vst [vmem:[%s4 + $0x18] sm:$0xff] %v340
  %407 = vst [vmem:[%s4 + $0x20] sm:$0xff] %v345
  %408 = vst [vmem:[%s4 + $0x28] sm:$0xff] %v350
  %409 = vst [vmem:[%s4 + $0x30] sm:$0xff] %v355
  %410 = vst [vmem:[%s4 + $0x38] sm:$0xff] %v360
  %411 = vst [vmem:[%s4 + $0x40] sm:$0xff] %v365
  %412 = vst [vmem:[%s4 + $0x48] sm:$0xff] %v370
  %413 = vst [vmem:[%s4 + $0x50] sm:$0xff] %v375
  %414 = vst [vmem:[%s4 + $0x58] sm:$0xff] %v380
  %415 = vst [vmem:[%s4 + $0x60] sm:$0xff] %v385
  %416 = vst [vmem:[%s4 + $0x68] sm:$0xff] %v390
  %417 = vst [vmem:[%s4 + $0x70] sm:$0xff] %v395
  %418 = vst [vmem:[%s4 + $0x78] sm:$0xff] %v400
  // Predicated region
  $region18: #{graph_convolution.1} parent=0 // pred_check
    _
  $region19: #{graph_convolution.1} parent=0 // pred_check_branch
    %420 = sbr.rel (0) target = $region21
  $region20: #{graph_convolution.1} parent=0 // pred_region
    _
  $region21: #{graph_convolution.1} parent=0 // pred_fallthru
    _
  // Predicated region
  $region22: #{graph_convolution.1} parent=0 // pred_check
    _
  $region23: #{graph_convolution.1} parent=0 // pred_check_branch
    %422 = sbr.rel (0) target = $region25
  $region24: #{graph_convolution.1} parent=0 // pred_region
    _
  $region25: #{graph_convolution.1} parent=0 // pred_fallthru
    _

</llo_original>
